<compile_context>
chip_gen: v6e
topology: v6e:2x2x1
jax: 0.10.0
libtpu: 0.0.40
codegen_flags: <defaults>
</compile_context>

<pallas_src>
import numpy as np
import jax
import jax.numpy as jnp
from jax import lax
from jax.experimental import pallas as pl
from jax.experimental.pallas import tpu as pltpu

LANE = 128
SUBLANE = 8


def _round_up(v, m):
    return -(-v // m) * m


def make_block_branch_specs(kernel_size, input_size):
    """Replicates Block.__init__ hyper-params for the convs used in forward()."""
    steps = int(np.floor(np.log2(input_size))) - 1
    if steps <= 1:
        steps = 1
    specs = []
    for i in range(steps):
        # dilated 'same' conv (torch 'same': left = total//2, right = total - left)
        d = 2 ** i
        total = d * (kernel_size - 1)
        specs.append(dict(k=kernel_size, dilation=d, stride=1,
                          pad_l=total // 2, pad_r=total - total // 2))
        # strided conv with explicit symmetric padding
        s = max(2 ** i - 1, 1)
        k = 2 ** (i + 1) + 1
        p = int(((s - 1) * input_size + k - 1) / 2)
        specs.append(dict(k=k, dilation=1, stride=s, pad_l=p, pad_r=p))
    used = specs[:steps]  # forward() uses only the first `steps` convs
    for sp in used:
        if sp["stride"] != 1:
            # TODO(synk): stride>1 branches only become reachable for input_size >= 128.
            raise NotImplementedError("stride>1 branch not supported in this kernel")
    return steps, used


def pack_block_params(torch_weights, torch_biases, branch_specs, sum_layers,
                      C_in, C_out, k_align=SUBLANE):
    """Pack all branch convs into one im2col RHS slab + one bias row.

    Returns (offsets, W (K_pad, C_out_total), bias (1, C_out_total), pad_l,
             C_out_total, K_pad).
    """
    # Only valid for stride-1, length-preserving branches (guarded upstream):
    assert all(sp["stride"] == 1 for sp in branch_specs)

    pad_l = max(sp["pad_l"] for sp in branch_specs)
    offs_per_branch = [
        [pad_l - sp["pad_l"] + t * sp["dilation"] for t in range(sp["k"])]
        for sp in branch_specs
    ]
    offsets = sorted({o for offs in offs_per_branch for o in offs})  # deduped taps
    off_idx = {o: i for i, o in enumerate(offsets)}
    n_off = len(offsets)
    n_br = len(branch_specs)
    C_out_total = C_out if sum_layers else n_br * C_out
    K = n_off * C_in
    K_pad = _round_up(K, k_align)  # sublane-align the contraction dim

    W = np.zeros((K_pad, C_out_total), np.float32)
    bias = np.zeros((1, C_out_total), np.float32)
    for j, (w, bvec, offs) in enumerate(zip(torch_weights, torch_biases, offs_per_branch)):
        w = np.asarray(w)  # torch layout (C_out, C_in, K)
        col0 = 0 if sum_layers else j * C_out
        for t, o in enumerate(offs):
            r0 = off_idx[o] * C_in
            # sum_layers=True: branches sharing an offset just add up (linearity)
            W[r0:r0 + C_in, col0:col0 + C_out] += w[:, :, t].T
        bias[0, col0:col0 + C_out] += np.asarray(bvec)
    return offsets, jnp.asarray(W), jnp.asarray(bias), pad_l, C_out_total, K_pad


def _choose_batch_tile(B, L, bytes_per_batch, budget_bytes,
                       min_grid_steps=4, mxu_rows=256):
    """Largest divisor of B fitting the VMEM byte budget, keeping the grid
    >= min(min_grid_steps, B) steps (pipelining + v7x 2-TC occupancy) and
    preferring MXU-aligned M = Bt*L (256 rows on v6e/v7x; use 128 on v5e)."""
    divisors = [d for d in range(1, B + 1) if B % d == 0]
    feasible = [d for d in divisors
                if d * bytes_per_batch <= budget_bytes
                and (B // d) >= min(min_grid_steps, B)]
    if not feasible:
        feasible = [1]
    aligned = [d for d in feasible if (d * L) % mxu_rows == 0]
    pool = aligned if aligned else feasible
    return max(pool)


def block_forward(x, torch_weights, torch_biases, branch_specs, sum_layers, C_out,
                  compute_dtype=jnp.float32, vmem_budget_bytes=24 << 20):
    """Fused Block.forward.  x: (B, L, C_in) channels-last, returned (B, L, C_out_total)."""
    B, L, C_in = x.shape
    offsets, W, bias, pad_l, C_out_total, K_pad = pack_block_params(
        torch_weights, torch_biases, branch_specs, sum_layers, C_in, C_out)
    K = len(offsets) * C_in

    # Weights are tiny and packed once host-side; x stays in its native dtype
    # (cast happens in-kernel, at the matmul input).
    W_c = W.astype(compute_dtype)

    # ---------------- VMEM budget -> batch tile ----------------
    x_item = np.dtype(x.dtype).itemsize
    w_item = np.dtype(compute_dtype).itemsize
    rows = _round_up(L, SUBLANE)
    per_bt = (2 * rows * _round_up(C_in, LANE) * x_item            # x block, double-buffered
              + 2 * rows * _round_up(C_out_total, LANE) * x_item   # out block, double-buffered
              + rows * _round_up(K_pad, LANE) * x_item)            # persistent LHS scratch
    fixed = (2 * _round_up(K_pad, SUBLANE) * _round_up(C_out_total, LANE) * w_item  # W (2 bufs)
             + 2 * SUBLANE * _round_up(C_out_total, LANE) * 4)                      # bias
    Bt = _choose_batch_tile(B, L, per_bt, max(vmem_budget_bytes - fixed, per_bt))

    vmem_estimate = fixed + Bt * per_bt
    cp_kwargs = dict(dimension_semantics=("parallel",))
    if vmem_estimate > (30 << 20):   # only raise above the 32 MiB scoped default if needed
        cp_kwargs["vmem_limit_bytes"] = int(vmem_estimate * 1.25)
    compiler_params = pltpu.CompilerParams(**cp_kwargs)

    def kernel(x_ref, w_ref, b_ref, o_ref, lhs_ref):
        # im2col: one shifted window per *unique* tap offset, written straight
        # into the persistent LHS scratch at static lane offsets.  Halo rows
        # (padding='same') are written as zeros — no padded-x staging buffer,
        # no jnp.concatenate materialization.
        for i, off in enumerate(offsets):
            lo = off - pad_l                 # window start in original coords
            a, b = max(lo, 0), min(lo + L, L)
            da, db = a - lo, b - lo          # destination rows inside the window
            c0 = i * C_in
            if da > 0:
                lhs_ref[:, :da, c0:c0 + C_in] = jnp.zeros((Bt, da, C_in), lhs_ref.dtype)
            if db < L:
                lhs_ref[:, db:, c0:c0 + C_in] = jnp.zeros((Bt, L - db, C_in), lhs_ref.dtype)
            if b > a:
                lhs_ref[:, da:db, c0:c0 + C_in] = x_ref[:, a:b, :]
        if K_pad > K:
            # Zero the K-alignment pad lanes (W rows there are zero, but stale
            # VMEM could be NaN and NaN*0 != 0).
            lhs_ref[:, :, K:] = jnp.zeros((Bt, L, K_pad - K), lhs_ref.dtype)

        # Cast the finished LHS to the MXU input dtype only here (staging stays
        # f32: no bf16 packed-pair shuffles in the im2col), f32 accumulation.
        lhs = lhs_ref[...].reshape(Bt * L, K_pad).astype(compute_dtype)
        acc = jnp.dot(lhs, w_ref[...], preferred_element_type=jnp.float32)
        acc = acc + b_ref[...]
        # Unpadded output: exactly C_out_total lanes go back to HBM.
        o_ref[...] = acc.reshape(Bt, L, C_out_total).astype(o_ref.dtype)

    call = pl.pallas_call(
        kernel,
        out_shape=jax.ShapeDtypeStruct((B, L, C_out_total), x.dtype),
        grid=(B // Bt,),
        in_specs=[
            pl.BlockSpec((Bt, L, C_in), lambda g: (g, 0, 0)),
            # Grid-invariant index maps: W / bias are DMA'd once and reused.
            # TODO(synk): single-buffer (pl.Buffered(1) / memory_space=VMEM) at
            # production C_in to reclaim the redundant second buffer.
            pl.BlockSpec((K_pad, C_out_total), lambda g: (0, 0)),
            pl.BlockSpec((1, C_out_total), lambda g: (0, 0)),
        ],
        out_specs=pl.BlockSpec((Bt, L, C_out_total), lambda g: (g, 0, 0)),
        scratch_shapes=[pltpu.VMEM((Bt, L, K_pad), x.dtype)],
        compiler_params=compiler_params,
    )
    return call(x, W_c, bias)


def reference_forward(x, torch_weights, torch_biases, branch_specs, sum_layers):
    """Pure-JAX reference mirroring the PyTorch forward (correctness check)."""
    xn = jnp.transpose(x, (0, 2, 1))  # (B, C_in, L)  == Permute()(x)
    outs = []
    for w, b, sp in zip(torch_weights, torch_biases, branch_specs):
        o = lax.conv_general_dilated(
            xn, w, window_strides=(sp["stride"],),
            padding=[(sp["pad_l"], sp["pad_r"])],
            rhs_dilation=(sp["dilation"],),
            dimension_numbers=("NCH", "OIH", "NCH"))
        o = o + b[None, :, None]
        outs.append(o)
    res = jnp.stack(outs).sum(axis=0) if sum_layers else jnp.concatenate(outs, axis=1)
    return jnp.transpose(res, (0, 2, 1))  # Permute() back


if __name__ == "__main__":
    # Small shapes consistent with the module: input_size=16 -> steps=3 branches used.
    B, L, C_in, C_out, ksize = 2, 16, 4, 8, 3
    steps, branch_specs = make_block_branch_specs(ksize, L)

    key = jax.random.PRNGKey(0)
    torch_weights, torch_biases = [], []
    for sp in branch_specs:
        key, k1, k2 = jax.random.split(key, 3)
        bound = 1.0 / np.sqrt(C_in * sp["k"])  # same scale as torch Conv1d default init
        torch_weights.append(
            jax.random.uniform(k1, (C_out, C_in, sp["k"]), jnp.float32, -bound, bound))
        torch_biases.append(
            jax.random.uniform(k2, (C_out,), jnp.float32, -bound, bound))
    key, kx = jax.random.split(key)
    x = jax.random.normal(kx, (B, L, C_in), jnp.float32)

    for sum_layers in (True, False):
        ref = reference_forward(x, torch_weights, torch_biases, branch_specs, sum_layers)

        # f32 MXU inputs (exact check)
        out = block_forward(x, torch_weights, torch_biases, branch_specs, sum_layers, C_out,
                            compute_dtype=jnp.float32)
        out = jax.block_until_ready(out)
        assert out.shape == ref.shape, (out.shape, ref.shape)
        np.testing.assert_allclose(np.asarray(out), np.asarray(ref), rtol=1e-4, atol=1e-4)

        # bf16 MXU inputs, f32 accumulation (production default) — looser tolerance
        out_bf = block_forward(x, torch_weights, torch_biases, branch_specs, sum_layers, C_out,
                               compute_dtype=jnp.bfloat16)
        out_bf = jax.block_until_ready(out_bf)
        assert out_bf.shape == ref.shape
        np.testing.assert_allclose(np.asarray(out_bf), np.asarray(ref), rtol=3e-2, atol=3e-2)

    print("KERNEL_OK")
</pallas_src>

<mosaic_0001>
module attributes {stable_mosaic.version = 11 : i64} {
  func.func @kernel(%arg0: i32, %arg1: memref<1x16x4xf32, #tpu.memory_space<vmem>>, %arg2: memref<24x8xf32, #tpu.memory_space<vmem>>, %arg3: memref<1x8xf32, #tpu.memory_space<vmem>>, %arg4: memref<1x16x8xf32, #tpu.memory_space<vmem>>, %arg5: memref<1x16x24xf32, #tpu.memory_space<vmem>>) attributes {dimension_semantics = [#tpu.dimension_semantics<parallel>], iteration_bounds = array<i64: 2>, scalar_prefetch = 0 : i64, scratch_operands = 1 : i64, tpu.core_type = #tpu.core_type<tc>, window_params = [{transform_indices = @transform_0, window_bounds = array<i64: 1, 16, 4>}, {pipeline_mode = #tpu.pipeline_mode<synchronous>, transform_indices = @transform_1, window_bounds = array<i64: 24, 8>}, {pipeline_mode = #tpu.pipeline_mode<synchronous>, transform_indices = @transform_2, window_bounds = array<i64: 1, 8>}, {transform_indices = @transform_3, window_bounds = array<i64: 1, 16, 8>}]} {
    %cst = arith.constant 0.000000e+00 : f32
    %0 = vector.broadcast %cst : f32 to vector<1x2x4xf32>
    %c0 = arith.constant 0 : index
    %c0_0 = arith.constant 0 : index
    %c0_1 = arith.constant 0 : index
    %1 = vector.load %arg5[%c0, %c0_0, %c0_1] : memref<1x16x24xf32, #tpu.memory_space<vmem>>, vector<1x2x4xf32>
    tpu.vector_store %arg5[%c0, %c0_0, %c0_1], %0 {strides = array<i32>} : memref<1x16x24xf32, #tpu.memory_space<vmem>>, vector<1x2x4xf32>,
    %c0_2 = arith.constant 0 : index
    %c0_3 = arith.constant 0 : index
    %c0_4 = arith.constant 0 : index
    %2 = vector.load %arg1[%c0_2, %c0_3, %c0_4] : memref<1x16x4xf32, #tpu.memory_space<vmem>>, vector<1x14x4xf32>
    %c0_5 = arith.constant 0 : index
    %c2 = arith.constant 2 : index
    %c0_6 = arith.constant 0 : index
    %3 = vector.load %arg5[%c0_5, %c2, %c0_6] : memref<1x16x24xf32, #tpu.memory_space<vmem>>, vector<1x14x4xf32>
    tpu.vector_store %arg5[%c0_5, %c2, %c0_6], %2 {strides = array<i32>} : memref<1x16x24xf32, #tpu.memory_space<vmem>>, vector<1x14x4xf32>,
    %cst_7 = arith.constant 0.000000e+00 : f32
    %4 = vector.broadcast %cst_7 : f32 to vector<1x1x4xf32>
    %c0_8 = arith.constant 0 : index
    %c0_9 = arith.constant 0 : index
    %c4 = arith.constant 4 : index
    %5 = vector.load %arg5[%c0_8, %c0_9, %c4] : memref<1x16x24xf32, #tpu.memory_space<vmem>>, vector<1x1x4xf32>
    tpu.vector_store %arg5[%c0_8, %c0_9, %c4], %4 {strides = array<i32>} : memref<1x16x24xf32, #tpu.memory_space<vmem>>, vector<1x1x4xf32>,
    %c0_10 = arith.constant 0 : index
    %c0_11 = arith.constant 0 : index
    %c0_12 = arith.constant 0 : index
    %6 = vector.load %arg1[%c0_10, %c0_11, %c0_12] : memref<1x16x4xf32, #tpu.memory_space<vmem>>, vector<1x15x4xf32>
    %c0_13 = arith.constant 0 : index
    %c1 = arith.constant 1 : index
    %c4_14 = arith.constant 4 : index
    %7 = vector.load %arg5[%c0_13, %c1, %c4_14] : memref<1x16x24xf32, #tpu.memory_space<vmem>>, vector<1x15x4xf32>
    tpu.vector_store %arg5[%c0_13, %c1, %c4_14], %6 {strides = array<i32>} : memref<1x16x24xf32, #tpu.memory_space<vmem>>, vector<1x15x4xf32>,
    %c0_15 = arith.constant 0 : index
    %c0_16 = arith.constant 0 : index
    %c0_17 = arith.constant 0 : index
    %8 = vector.load %arg1[%c0_15, %c0_16, %c0_17] : memref<1x16x4xf32, #tpu.memory_space<vmem>>, vector<1x16x4xf32>
    %c0_18 = arith.constant 0 : index
    %c0_19 = arith.constant 0 : index
    %c8 = arith.constant 8 : index
    %9 = vector.load %arg5[%c0_18, %c0_19, %c8] : memref<1x16x24xf32, #tpu.memory_space<vmem>>, vector<1x16x4xf32>
    tpu.vector_store %arg5[%c0_18, %c0_19, %c8], %8 {strides = array<i32>} : memref<1x16x24xf32, #tpu.memory_space<vmem>>, vector<1x16x4xf32>,
    %cst_20 = arith.constant 0.000000e+00 : f32
    %10 = vector.broadcast %cst_20 : f32 to vector<1x1x4xf32>
    %c0_21 = arith.constant 0 : index
    %c15 = arith.constant 15 : index
    %c12 = arith.constant 12 : index
    %11 = vector.load %arg5[%c0_21, %c15, %c12] : memref<1x16x24xf32, #tpu.memory_space<vmem>>, vector<1x1x4xf32>
    tpu.vector_store %arg5[%c0_21, %c15, %c12], %10 {strides = array<i32>} : memref<1x16x24xf32, #tpu.memory_space<vmem>>, vector<1x1x4xf32>,
    %c0_22 = arith.constant 0 : index
    %c1_23 = arith.constant 1 : index
    %c0_24 = arith.constant 0 : index
    %12 = vector.load %arg1[%c0_22, %c1_23, %c0_24] : memref<1x16x4xf32, #tpu.memory_space<vmem>>, vector<1x15x4xf32>
    %c0_25 = arith.constant 0 : index
    %c0_26 = arith.constant 0 : index
    %c12_27 = arith.constant 12 : index
    %13 = vector.load %arg5[%c0_25, %c0_26, %c12_27] : memref<1x16x24xf32, #tpu.memory_space<vmem>>, vector<1x15x4xf32>
    tpu.vector_store %arg5[%c0_25, %c0_26, %c12_27], %12 {strides = array<i32>} : memref<1x16x24xf32, #tpu.memory_space<vmem>>, vector<1x15x4xf32>,
    %cst_28 = arith.constant 0.000000e+00 : f32
    %14 = vector.broadcast %cst_28 : f32 to vector<1x2x4xf32>
    %c0_29 = arith.constant 0 : index
    %c14 = arith.constant 14 : index
    %c16 = arith.constant 16 : index
    %15 = vector.load %arg5[%c0_29, %c14, %c16] : memref<1x16x24xf32, #tpu.memory_space<vmem>>, vector<1x2x4xf32>
    tpu.vector_store %arg5[%c0_29, %c14, %c16], %14 {strides = array<i32>} : memref<1x16x24xf32, #tpu.memory_space<vmem>>, vector<1x2x4xf32>,
    %c0_30 = arith.constant 0 : index
    %c2_31 = arith.constant 2 : index
    %c0_32 = arith.constant 0 : index
    %16 = vector.load %arg1[%c0_30, %c2_31, %c0_32] : memref<1x16x4xf32, #tpu.memory_space<vmem>>, vector<1x14x4xf32>
    %c0_33 = arith.constant 0 : index
    %c0_34 = arith.constant 0 : index
    %c16_35 = arith.constant 16 : index
    %17 = vector.load %arg5[%c0_33, %c0_34, %c16_35] : memref<1x16x24xf32, #tpu.memory_space<vmem>>, vector<1x14x4xf32>
    tpu.vector_store %arg5[%c0_33, %c0_34, %c16_35], %16 {strides = array<i32>} : memref<1x16x24xf32, #tpu.memory_space<vmem>>, vector<1x14x4xf32>,
    %cst_36 = arith.constant 0.000000e+00 : f32
    %18 = vector.broadcast %cst_36 : f32 to vector<1x16x4xf32>
    %c0_37 = arith.constant 0 : index
    %c0_38 = arith.constant 0 : index
    %c20 = arith.constant 20 : index
    %19 = vector.load %arg5[%c0_37, %c0_38, %c20] : memref<1x16x24xf32, #tpu.memory_space<vmem>>, vector<1x16x4xf32>
    tpu.vector_store %arg5[%c0_37, %c0_38, %c20], %18 {strides = array<i32>} : memref<1x16x24xf32, #tpu.memory_space<vmem>>, vector<1x16x4xf32>,
    %c0_39 = arith.constant 0 : index
    %c0_40 = arith.constant 0 : index
    %c0_41 = arith.constant 0 : index
    %20 = vector.load %arg5[%c0_39, %c0_40, %c0_41] : memref<1x16x24xf32, #tpu.memory_space<vmem>>, vector<1x16x24xf32>
    %21 = vector.shape_cast %20 : vector<1x16x24xf32> to vector<16x24xf32>
    %c0_42 = arith.constant 0 : index
    %c0_43 = arith.constant 0 : index
    %22 = vector.load %arg2[%c0_42, %c0_43] : memref<24x8xf32, #tpu.memory_space<vmem>>, vector<24x8xf32>
    %cst_44 = arith.constant dense<0.000000e+00> : vector<16x8xf32>
    %23 = tpu.matmul %21, %22, %cst_44 {dimension_numbers = #tpu.dot_dimension_numbers<[1], [0], [0], [1], [0, 0, 1, 1], [], []>} : vector<16x24xf32>, vector<24x8xf32>, vector<16x8xf32> -> vector<16x8xf32>
    %c0_45 = arith.constant 0 : index
    %c0_46 = arith.constant 0 : index
    %24 = vector.load %arg3[%c0_45, %c0_46] : memref<1x8xf32, #tpu.memory_space<vmem>>, vector<1x8xf32>
    %25 = vector.broadcast %24 : vector<1x8xf32> to vector<16x8xf32>
    %26 = arith.addf %23, %25 : vector<16x8xf32>
    %27 = vector.shape_cast %26 : vector<16x8xf32> to vector<1x16x8xf32>
    %c0_47 = arith.constant 0 : index
    %c0_48 = arith.constant 0 : index
    %c0_49 = arith.constant 0 : index
    %28 = vector.load %arg4[%c0_47, %c0_48, %c0_49] : memref<1x16x8xf32, #tpu.memory_space<vmem>>, vector<1x16x8xf32>
    tpu.vector_store %arg4[%c0_47, %c0_48, %c0_49], %27 {strides = array<i32>} : memref<1x16x8xf32, #tpu.memory_space<vmem>>, vector<1x16x8xf32>,
    return
  }
  func.func @transform_0(%arg0: i32) -> (i32, i32, i32) {
    %c0_i32 = arith.constant 0 : i32
    %c0_i32_0 = arith.constant 0 : i32
    %c0_i32_1 = arith.constant 0 : i32
    return %arg0, %c0_i32, %c0_i32_0 : i32, i32, i32
  }
  func.func @transform_1(%arg0: i32) -> (i32, i32) {
    %c0_i32 = arith.constant 0 : i32
    %c0_i32_0 = arith.constant 0 : i32
    %c0_i32_1 = arith.constant 0 : i32
    return %c0_i32, %c0_i32_0 : i32, i32
  }
  func.func @transform_2(%arg0: i32) -> (i32, i32) {
    %c0_i32 = arith.constant 0 : i32
    %c0_i32_0 = arith.constant 0 : i32
    %c0_i32_1 = arith.constant 0 : i32
    return %c0_i32, %c0_i32_0 : i32, i32
  }
  func.func @transform_3(%arg0: i32) -> (i32, i32, i32) {
    %c0_i32 = arith.constant 0 : i32
    %c0_i32_0 = arith.constant 0 : i32
    %c0_i32_1 = arith.constant 0 : i32
    return %arg0, %c0_i32, %c0_i32_0 : i32, i32, i32
  }
}

</mosaic_0001>

<llo_original>
// kernel: tpu_custom_call.1
$region0: #{tpu_custom_call.1}
  #allocation0 [shape = 'u32[]', space=smem, size = 0x4, offset = 0x4, fixed_abs, tag = 'smem constant byte address 0x4 - core index']
  #allocation1 [shape = 'u32[144,128]{1,0:T(1,128)}', space=vmem, size = 0x12000, scoped, tag = 'internal scratch']
  #allocation2 [shape = 'f32[1,16,24]{2,1,0:T(8,128)}', space=vmem, size = 0x2000, scoped, tag = 'scratch operand']
  %s0 = inlined_call_operand.vmem [shape: f32[2,16,4], index: 0, kind: input, shape index: {}]
  %s1 = inlined_call_operand.vmem [shape: f32[24,8], index: 1, kind: input, shape index: {}]
  %s2 = inlined_call_operand.vmem [shape: f32[1,8], index: 2, kind: input, shape index: {}]
  %s3 = inlined_call_operand.vmem [shape: f32[2,16,8], index: 3, kind: output, shape index: {}]
  %s4 = sld [smem:[#allocation0]]
  $region45: #{tpu_custom_call.1} parent=0
    _
  %s6 = ssub.s32 1, %s4
  %s7 = scalar_select 0, %s6, %s4
  loop: start=0, step=1, limit=4
  $region2: #{tpu_custom_call.1} parent=0 // loop_pre_header
    _
  $region3: #{tpu_custom_call.1} parent=0 // loop_header
    %s9 = sphi 0, %s13
    %p10 = scmp.ge.s32.totalorder %s9, 4
    %s19 = sphi 0, %s21
    %s22 = sphi 0, %s19
    %s23 = sphi 0, %s22
    %s39 = sphi 0, %s23
    %s43 = sphi 0, %s43
    %s45 = sphi 0, %s43
    %s46 = sphi 0, %s45
    %s60 = sphi 0, %s46
    %s64 = sphi 0, %s64
    %s66 = sphi 0, %s64
    %s67 = sphi 0, %s66
    %s81 = sphi 0, %s67
    %s87 = sphi 0, %s89
    %s90 = sphi 0, %s87
    %s91 = sphi 0, %s90
    %s107 = sphi 0, %s91
  $region4: #{tpu_custom_call.1} parent=0 // loop_header_branch
    %12 = sbr.rel (%p10) target = $region8
  $region5: #{tpu_custom_call.1} parent=0 // loop_body
    %s14 = ssub.s32 %s9, 1
    %s15 = ssub.s32 %s9, 2
    %s16 = sadd.s32 %s9, 1
    %s17 = ssub.s32 %s9, %s16
    %p18 = scmp.eq.s32.totalorder %s17, 0
    %s20 = sadd.s32 %s19, 1
    %s21 = scalar_select %p18, %s19, %s20
    %p24 = pneg %p18
    %p25 = scmp.eq.s32.totalorder %s9, 1
    %p26 = por %p24, %p25
    %p27 = scmp.ne.s32.totalorder %s19, %s22
    %p28 = scmp.eq.s32.totalorder %s9, 0
    %p29 = por %p27, %p28
    %p30 = scmp.ne.s32.totalorder %s19, %s22
    %p31 = scmp.eq.s32.totalorder %s14, 1
    %p32 = por %p30, %p31
    %p33 = scmp.ne.s32.totalorder %s22, %s23
    %p34 = scmp.eq.s32.totalorder %s14, 0
    %p35 = por %p33, %p34
    %p36 = scmp.ne.s32.totalorder %s22, %s23
    %p37 = scmp.eq.s32.totalorder %s15, 1
    %p38 = por %p36, %p37
    %p40 = scmp.ne.s32.totalorder %s23, %s39
    %p41 = scmp.eq.s32.totalorder %s15, 0
    %p42 = por %p40, %p41
    %s44 = sadd.s32 %s43, 1
    %p47 = scmp.eq.s32.totalorder %s9, 1
    %p48 = scmp.ne.s32.totalorder %s43, %s45
    %p49 = scmp.eq.s32.totalorder %s9, 0
    %p50 = por %p48, %p49
    %p51 = scmp.ne.s32.totalorder %s43, %s45
    %p52 = scmp.eq.s32.totalorder %s14, 1
    %p53 = por %p51, %p52
    %p54 = scmp.ne.s32.totalorder %s45, %s46
    %p55 = scmp.eq.s32.totalorder %s14, 0
    %p56 = por %p54, %p55
    %p57 = scmp.ne.s32.totalorder %s45, %s46
    %p58 = scmp.eq.s32.totalorder %s15, 1
    %p59 = por %p57, %p58
    %p61 = scmp.ne.s32.totalorder %s46, %s60
    %p62 = scmp.eq.s32.totalorder %s15, 0
    %p63 = por %p61, %p62
    %s65 = sadd.s32 %s64, 1
    %p68 = scmp.eq.s32.totalorder %s9, 1
    %p69 = scmp.ne.s32.totalorder %s64, %s66
    %p70 = scmp.eq.s32.totalorder %s9, 0
    %p71 = por %p69, %p70
    %p72 = scmp.ne.s32.totalorder %s64, %s66
    %p73 = scmp.eq.s32.totalorder %s14, 1
    %p74 = por %p72, %p73
    %p75 = scmp.ne.s32.totalorder %s66, %s67
    %p76 = scmp.eq.s32.totalorder %s14, 0
    %p77 = por %p75, %p76
    %p78 = scmp.ne.s32.totalorder %s66, %s67
    %p79 = scmp.eq.s32.totalorder %s15, 1
    %p80 = por %p78, %p79
    %p82 = scmp.ne.s32.totalorder %s67, %s81
    %p83 = scmp.eq.s32.totalorder %s15, 0
    %p84 = por %p82, %p83
    %s85 = ssub.s32 %s9, %s16
    %p86 = scmp.eq.s32.totalorder %s85, 0
    %s88 = sadd.s32 %s87, 1
    %s89 = scalar_select %p86, %s87, %s88
    %p92 = pneg %p86
    %p93 = scmp.eq.s32.totalorder %s9, 1
    %p94 = por %p92, %p93
    %p95 = scmp.ne.s32.totalorder %s87, %s90
    %p96 = scmp.eq.s32.totalorder %s9, 0
    %p97 = por %p95, %p96
    %p98 = scmp.ne.s32.totalorder %s87, %s90
    %p99 = scmp.eq.s32.totalorder %s14, 1
    %p100 = por %p98, %p99
    %p101 = scmp.ne.s32.totalorder %s90, %s91
    %p102 = scmp.eq.s32.totalorder %s14, 0
    %p103 = por %p101, %p102
    %p104 = scmp.ne.s32.totalorder %s90, %s91
    %p105 = scmp.eq.s32.totalorder %s15, 1
    %p106 = por %p104, %p105
    %p108 = scmp.ne.s32.totalorder %s91, %s107
    %p109 = scmp.eq.s32.totalorder %s15, 0
    %p110 = por %p108, %p109
    %p111 = scmp.le.s32.totalorder 1, %s9
    %p112 = scmp.lt.s32.totalorder %s9, 3
    %p113 = pnand %p111, %p112
    %p114 = pneg %p113
    // Predicated region
    $region9: #{tpu_custom_call.1} parent=5 // pred_check
      _
    $region10: #{tpu_custom_call.1} parent=5 // pred_check_branch
      %116 = sbr.rel (%p113) target = $region12
    $region11: #{tpu_custom_call.1} parent=5 // pred_region
      %s117 = ssub.s32 %s9, 1
      // Predicated region
      $region13: #{tpu_custom_call.1} parent=11 // pred_check
        %p118 = pneg %p56
      $region14: #{tpu_custom_call.1} parent=11 // pred_check_branch
        %120 = sbr.rel (%p118) target = $region16
      $region15: #{tpu_custom_call.1} parent=11 // pred_region
        _
      $region16: #{tpu_custom_call.1} parent=11 // pred_fallthru
        _
      // Predicated region
      $region17: #{tpu_custom_call.1} parent=11 // pred_check
        %p121 = pneg %p77
      $region18: #{tpu_custom_call.1} parent=11 // pred_check_branch
        %123 = sbr.rel (%p121) target = $region20
      $region19: #{tpu_custom_call.1} parent=11 // pred_region
        _
      $region20: #{tpu_custom_call.1} parent=11 // pred_fallthru
        _
    $region12: #{tpu_custom_call.1} parent=5 // pred_fallthru
      _
    %p124 = scmp.lt.s32.totalorder %s9, 2
    // Predicated region
    $region21: #{tpu_custom_call.1} parent=5 // pred_check
      %p125 = pneg %p124
    $region22: #{tpu_custom_call.1} parent=5 // pred_check_branch
      %127 = sbr.rel (%p125) target = $region24
    $region23: #{tpu_custom_call.1} parent=5 // pred_region
      // Predicated region
      $region25: #{tpu_custom_call.1} parent=23 // pred_check
        %p128 = pneg %p29
      $region26: #{tpu_custom_call.1} parent=23 // pred_check_branch
        %130 = sbr.rel (%p128) target = $region28
      $region27: #{tpu_custom_call.1} parent=23 // pred_region
        %p131 = scmp.lt.s32.totalorder %s9, 1
        %s132 = scalar_select %p131, %s9, 1
        %s133 = smul.addr %s132, 2
        %s134 = smul.addr %s133, 8
        %s135 = scalar_lea.vmem %s0, %s134
      $region28: #{tpu_custom_call.1} parent=23 // pred_fallthru
        _
    $region24: #{tpu_custom_call.1} parent=5 // pred_fallthru
      _
    %p136 = scmp.le.s32.totalorder 1, %s9
    %p137 = scmp.lt.s32.totalorder %s9, 3
    %p138 = pnand %p136, %p137
    %p139 = pneg %p138
    // Predicated region
    $region29: #{tpu_custom_call.1} parent=5 // pred_check
      _
    $region30: #{tpu_custom_call.1} parent=5 // pred_check_branch
      %141 = sbr.rel (%p138) target = $region32
    $region31: #{tpu_custom_call.1} parent=5 // pred_region
      %s142 = ssub.s32 %s9, 1
      %p143 = scmp.lt.s32.totalorder %s14, 1
      %s144 = scalar_select %p143, %s14, 1
      %s145 = smul.addr %s144, 2
      %s146 = smul.addr %s145, 8
      %s147 = scalar_lea.vmem %s0, %s146
      %p148 = pneg %p35
      %p149 = pneg %p32
      %p150 = pneg %p56
      %p151 = pneg %p53
      %p152 = pneg %p77
      %p153 = pneg %p74
      %p154 = pneg %p103
      %p155 = pneg %p100
      %p156 = scmp.lt.s32.totalorder %s14, 1
      %s157 = scalar_select %p156, %s14, 1
      %s158 = smul.addr %s157, 2
      %s159 = smul.addr %s158, 8
      %s160 = scalar_lea.vmem %s3, %s159
      %p161 = scmp.lt.s32.totalorder %s14, 1
      %s162 = scalar_select %p161, %s14, 1
      %s163 = smul.addr %s162, 2
      %s164 = smul.addr %s163, 8
      %s165 = scalar_lea.vmem %s0, %s164
      %p166 = scmp.lt.s32.totalorder %s14, 1
      %s167 = scalar_select %p166, %s14, 1
      %s168 = smul.addr %s167, 2
      %s169 = smul.addr %s168, 8
      %s170 = scalar_lea.vmem %s3, %s169
      %vm171 = vcmask 25600
      %172 = vst.msk [vmem:[#allocation2] sm:$0x3] %vm171, 0.0
      %v173 = vld [vmem:[%s165] sm:$0xff]
      %v174 = vld [vmem:[%s165 + $0x8] sm:$0x3f]
      %vm175 = vcmask 31744
      %176 = vst.msk [vmem:[#allocation2 + $0x2] sm:$0xff] %vm175, %v173
      %vm177 = vcmask 29696
      %178 = vst.msk [vmem:[#allocation2 + $0xa] sm:$0x3f] %vm177, %v174
      %vm179 = vcmask 57376
      %180 = vst.msk [vmem:[#allocation2] sm:$0x1] %vm179, 0.0
      %v181 = vld [vmem:[%s165] sm:$0xff]
      %v182 = vld [vmem:[%s165 + $0x8] sm:$0x7f]
      %185 = vrot.lane.b32.xlu0 %v181, 4
      %v186 = vpop.permute.xlu0 %185
      %187 = vrot.lane.b32.xlu0 %v182, 4
      %v188 = vpop.permute.xlu0 %187
      %vm191 = vcmask 64544
      %192 = vst.msk [vmem:[#allocation2 + $0x1] sm:$0xff] %vm191, %v186
      %vm193 = vcmask 63520
      %194 = vst.msk [vmem:[#allocation2 + $0x9] sm:$0x7f] %vm193, %v188
      %v195 = vld [vmem:[%s165] sm:$0xff]
      %v196 = vld [vmem:[%s165 + $0x8] sm:$0xff]
      %199 = vrot.lane.b32.xlu0 %v195, 8
      %v200 = vpop.permute.xlu0 %199
      %201 = vrot.lane.b32.xlu0 %v196, 8
      %v202 = vpop.permute.xlu0 %201
      %vm205 = vcmask 97344
      %206 = vst.msk [vmem:[#allocation2] sm:$0xff] %vm205, %v200
      %207 = vst.msk [vmem:[#allocation2 + $0x8] sm:$0xff] %vm205, %v202
      %vm208 = vcmask 122976
      %209 = vst.msk [vmem:[#allocation2 + $0xf] sm:$0x1] %vm208, 0.0
      %v210 = vld [vmem:[%s165 + $0x1] sm:$0xff]
      %v211 = vld [vmem:[%s165 + $0x9] sm:$0x7f]
      %214 = vrot.lane.b32.xlu0 %v210, 12
      %v215 = vpop.permute.xlu0 %214
      %216 = vrot.lane.b32.xlu0 %v211, 12
      %v217 = vpop.permute.xlu0 %216
      %vm220 = vcmask 130144
      %221 = vst.msk [vmem:[#allocation2] sm:$0xff] %vm220, %v215
      %vm222 = vcmask 129120
      %223 = vst.msk [vmem:[#allocation2 + $0x8] sm:$0x7f] %vm222, %v217
      %vm224 = vcmask 156800
      %225 = vst.msk [vmem:[#allocation2 + $0xe] sm:$0x3] %vm224, 0.0
      %v226 = vld [vmem:[%s165 + $0x2] sm:$0xff]
      %v227 = vld [vmem:[%s165 + $0xa] sm:$0x3f]
      %230 = vrot.lane.b32.xlu0 %v226, 16
      %v231 = vpop.permute.xlu0 %230
      %232 = vrot.lane.b32.xlu0 %v227, 16
      %v233 = vpop.permute.xlu0 %232
      %vm236 = vcmask 162944
      %237 = vst.msk [vmem:[#allocation2] sm:$0xff] %vm236, %v231
      %vm238 = vcmask 160896
      %239 = vst.msk [vmem:[#allocation2 + $0x8] sm:$0x3f] %vm238, %v233
      %vm240 = vcmask 195744
      %241 = vst.msk [vmem:[#allocation2] sm:$0xff] %vm240, 0.0
      %242 = vst.msk [vmem:[#allocation2 + $0x8] sm:$0xff] %vm240, 0.0
      %v243 = vld [vmem:[#allocation2] sm:$0xff]
      %v244 = vld [vmem:[#allocation2 + $0x8] sm:$0xff]
      %v245 = vld [vmem:[%s1] sm:$0xff]
      %v246 = vld [vmem:[%s1 + $0x8] sm:$0xff]
      %v247 = vld [vmem:[%s1 + $0x10] sm:$0xff]
      %v248 = vld [vmem:[%s2] sm:$0x1]
      %v250 = vlaneseq
      %v251 = vshrl.u32 %v250, 7
      %v252 = vsub.s32 0, %v251
      %v253 = vrot.slane %v248, %v252
      %vm255 = vcmask 195584
      %v257 = vsel %vm255, %v243, 0
      %v260 = vsel %vm255, %v244, 0
      %262 = vmatprep.subr.mxu0 0.0
      %263 = vmatpush1.msra.mxu0 0.0
      %264 = vmatprep.subr.mxu0 0.0
      %265 = vmatpush1.msra.mxu0 0.0
      %266 = vmatprep.subr.mxu0 0.0
      %267 = vmatpush1.msra.mxu0 0.0
      %268 = vmatprep.subr.mxu0 0.0
      %269 = vmatpush1.msra.mxu0 0.0
      %270 = vmatprep.subr.mxu0 0.0
      %271 = vmatpush1.msra.mxu0 0.0
      %272 = vmatprep.subr.mxu0 0.0
      %273 = vmatpush1.msra.mxu0 0.0
      %274 = vmatprep.subr.mxu0 0.0
      %275 = vmatpush1.msra.mxu0 0.0
      %276 = vmatprep.subr.mxu0 0.0
      %277 = vmatpush1.msra.mxu0 0.0
      %278 = vmatprep.subr.mxu0 0.0
      %279 = vmatpush1.msra.mxu0 0.0
      %280 = vmatprep.subr.mxu0 0.0
      %281 = vmatpush1.msra.mxu0 0.0
      %282 = vmatprep.subr.mxu0 0.0
      %283 = vmatpush1.msra.mxu0 0.0
      %284 = vmatprep.subr.mxu0 0.0
      %285 = vmatpush1.msra.mxu0 0.0
      %286 = vmatprep.subr.mxu0 0.0
      %287 = vmatpush1.msra.mxu0 0.0
      %288 = vmatprep.subr.mxu0 0.0
      %289 = vmatpush1.msra.mxu0 %v247
      %290 = vmatprep.subr.mxu0 0.0
      %291 = vmatpush1.msra.mxu0 %v246
      %292 = vmatprep.subr.mxu0 0.0
      %293 = vmatpush1.msra.mxu0 %v245
      %294 = vmatprep.subr.mxu0 0.0
      %295 = vmatpush2.msra.mxu0 0.0
      %296 = vmatprep.subr.mxu0 0.0
      %297 = vmatpush2.msra.mxu0 0.0
      %298 = vmatprep.subr.mxu0 0.0
      %299 = vmatpush2.msra.mxu0 0.0
      %300 = vmatprep.subr.mxu0 0.0
      %301 = vmatpush2.msra.mxu0 0.0
      %302 = vmatprep.subr.mxu0 0.0
      %303 = vmatpush2.msra.mxu0 0.0
      %304 = vmatprep.subr.mxu0 0.0
      %305 = vmatpush2.msra.mxu0 0.0
      %306 = vmatprep.subr.mxu0 0.0
      %307 = vmatpush2.msra.mxu0 0.0
      %308 = vmatprep.subr.mxu0 0.0
      %309 = vmatpush2.msra.mxu0 0.0
      %310 = vmatprep.subr.mxu0 0.0
      %311 = vmatpush2.msra.mxu0 0.0
      %312 = vmatprep.subr.mxu0 0.0
      %313 = vmatpush2.msra.mxu0 0.0
      %314 = vmatprep.subr.mxu0 0.0
      %315 = vmatpush2.msra.mxu0 0.0
      %316 = vmatprep.subr.mxu0 0.0
      %317 = vmatpush2.msra.mxu0 0.0
      %318 = vmatprep.subr.mxu0 0.0
      %319 = vmatpush2.msra.mxu0 0.0
      %320 = vmatprep.subr.mxu0 0.0
      %321 = vmatpush2.msra.mxu0 0.0
      %322 = vmatprep.subr.mxu0 0.0
      %323 = vmatpush2.msra.mxu0 0.0
      %324 = vmatprep.subr.mxu0 0.0
      %325 = vmatpush2.msra.mxu0 0.0
      %326 = vmatprep.mubr.f32.mxu0 0.0
      %327 = vmatmul.mubr.f32.gmra.mxu0 %v257
      %v328 = vpop.f32.mrf.mxu0
      %v329 = vadd.f32 %v253, %v328
      %v330 = vpop.f32.mrf.mxu0
      %331 = vmatprep.mubr.f32.mxu0 0.0
      %332 = vmatmul.mubr.f32.gmra.mxu0 %v260
      %v333 = vpop.f32.mrf.mxu0
      %v334 = vadd.f32 %v253, %v333
      %v335 = vpop.f32.mrf.mxu0
      %336 = vdwg.mxu0
      %vm337 = vcmask 64512
      %338 = vst.msk [vmem:[%s170] sm:$0xff] %vm337, %v329
      %339 = vst.msk [vmem:[%s170 + $0x8] sm:$0xff] %vm337, %v334
      %p340 = scmp.lt.s32.totalorder %s14, 1
      %s341 = scalar_select %p340, %s14, 1
      %s342 = smul.addr %s341, 2
      %s343 = smul.addr %s342, 8
      %s344 = scalar_lea.vmem %s3, %s343
      // Predicated region
      $region33: #{tpu_custom_call.1} parent=31 // pred_check
        %p345 = pneg %p100
      $region34: #{tpu_custom_call.1} parent=31 // pred_check_branch
        %347 = sbr.rel (%p345) target = $region36
      $region35: #{tpu_custom_call.1} parent=31 // pred_region
        _
      $region36: #{tpu_custom_call.1} parent=31 // pred_fallthru
        _
    $region32: #{tpu_custom_call.1} parent=5 // pred_fallthru
      _
    %p348 = scmp.le.s32.totalorder 2, %s9
    // Predicated region
    $region37: #{tpu_custom_call.1} parent=5 // pred_check
      %p349 = pneg %p348
    $region38: #{tpu_custom_call.1} parent=5 // pred_check_branch
      %351 = sbr.rel (%p349) target = $region40
    $region39: #{tpu_custom_call.1} parent=5 // pred_region
      %s352 = ssub.s32 %s9, 2
      // Predicated region
      $region41: #{tpu_custom_call.1} parent=39 // pred_check
        %p353 = pneg %p106
      $region42: #{tpu_custom_call.1} parent=39 // pred_check_branch
        %355 = sbr.rel (%p353) target = $region44
      $region43: #{tpu_custom_call.1} parent=39 // pred_region
        %p356 = scmp.lt.s32.totalorder %s15, 1
        %s357 = scalar_select %p356, %s15, 1
        %s358 = smul.addr %s357, 2
        %s359 = smul.addr %s358, 8
        %s360 = scalar_lea.vmem %s3, %s359
      $region44: #{tpu_custom_call.1} parent=39 // pred_fallthru
        _
    $region40: #{tpu_custom_call.1} parent=5 // pred_fallthru
      _
  $region6: #{tpu_custom_call.1} parent=0 // loop_footer
    %s13 = sadd.s32 1, %s9
  $region7: #{tpu_custom_call.1} parent=0 // loop_footer_branch
    %8 = sbr.rel target = $region3
  $region8: #{tpu_custom_call.1} parent=0 // loop_exit
    _

</llo_original>
